<compile_context>
chip_gen: v5e
topology: v5e:2x2
jax: 0.10.0
libtpu: 0.0.40
codegen_flags: <defaults>
</compile_context>

<pallas_src>
import functools

import jax
import jax.numpy as jnp
from jax.experimental import pallas as pl
from jax.experimental.pallas import tpu as pltpu

SMOOTHING = 0.01

# Bytes of *input* data streamed per grid step per input (pipeline block size).
_TARGET_BLOCK_BYTES = 4 * 1024 * 1024
# Safe on all generations: v5e/v6e have 128 MiB physical VMEM, v7x has 64 MiB.
_VMEM_LIMIT_BYTES = 48 * 1024 * 1024
_LANE_WIDTHS = (8192, 4096, 2048, 1024, 512, 256, 128)


def _dice_partial_kernel(yt_ref, yp_ref, inter_out, denom_out,
                         inter_acc, denom_acc, *,
                         rows, rb, n_blocks, blocks_per_slab,
                         mask_tail, has_phantom):
    """Grid = (num_slabs [parallel], blocks_per_slab [arbitrary reduction]).

    inter_acc / denom_acc are (1, W) f32 VMEM scratch accumulators (per-lane partial
    sums of y_true*y_pred and y_true+y_pred).  inter_out / denom_out are tiny
    (1, 1, 128) per-slab output blocks holding the cross-lane-reduced scalar,
    written only on the last inner step.
    """
    s = pl.program_id(0)
    i = pl.program_id(1)
    b = s * blocks_per_slab + i   # global block index (may overhang when has_phantom)

    @pl.when(i == 0)
    def _():
        inter_acc[...] = jnp.zeros_like(inter_acc)
        denom_acc[...] = jnp.zeros_like(denom_acc)

    def accumulate(masked):
        yt = yt_ref[...].astype(jnp.float32)
        yp = yp_ref[...].astype(jnp.float32)
        if masked:
            # Only the globally-last real block can hang over the end of the row range.
            row0 = b * rb
            ridx = jax.lax.broadcasted_iota(jnp.int32, yt.shape, 0) + row0
            valid = ridx < rows
            yt = jnp.where(valid, yt, 0.0)
            yp = jnp.where(valid, yp, 0.0)
        # Reduce only along the row (sublane) axis; keep lane-wide vector partials.
        inter_acc[...] += jnp.sum(yt * yp, axis=0, keepdims=True)
        denom_acc[...] += jnp.sum(yt + yp, axis=0, keepdims=True)

    if mask_tail:
        # Mask work is confined to the single ragged tail block.
        @pl.when(b == n_blocks - 1)
        def _():
            accumulate(True)

        @pl.when(b < n_blocks - 1)
        def _():
            accumulate(False)
    elif has_phantom:
        # Rows divide evenly into blocks, but one slab carries a phantom block: skip it.
        @pl.when(b < n_blocks)
        def _():
            accumulate(False)
    else:
        accumulate(False)

    @pl.when(i == blocks_per_slab - 1)
    def _():
        # Fused cross-lane reduce: epilogue only has to sum num_slabs scalars.
        inter_out[...] = jnp.full(inter_out.shape, jnp.sum(inter_acc[...]), jnp.float32)
        denom_out[...] = jnp.full(denom_out.shape, jnp.sum(denom_acc[...]), jnp.float32)


@functools.partial(jax.jit, static_argnames=("target_block_bytes",))
def dice(y_true, y_pred, target_block_bytes=_TARGET_BLOCK_BYTES):
    """Pallas implementation of Dice.forward(y_true, y_pred). Returns a scalar f32."""
    total = y_true.size
    yt = jnp.reshape(y_true, (-1,))
    yp = jnp.reshape(y_pred, (-1,))

    # Pick a lane width W (multiple of 128) that divides the element count exactly,
    # preferring one that yields >= 8 rows (full sublane fill).  Only if the total is
    # not a multiple of 128 do we fall back to a one-time zero pad (sum-neutral).
    w = 0
    for cand in _LANE_WIDTHS:
        if total % cand == 0 and total // cand >= 8:
            w = cand
            break
    if w == 0:
        for cand in _LANE_WIDTHS:
            if total % cand == 0:
                w = cand
                break
    if w == 0:
        # TODO(synk): this fallback copies the inputs once; only hit when the total
        # element count is not a multiple of 128.
        w = 512
        padded = pl.cdiv(total, w) * w
        yt = jnp.pad(yt, (0, padded - total))
        yp = jnp.pad(yp, (0, padded - total))

    rows = yt.shape[0] // w
    yt = jnp.reshape(yt, (rows, w))   # free: contiguous row-major view
    yp = jnp.reshape(yp, (rows, w))

    # Rows per block: ~target_block_bytes of input per grid step, multiple of 8 sublanes.
    itemsize = max(jnp.dtype(yt.dtype).itemsize, jnp.dtype(yp.dtype).itemsize)
    target_rows = max(8, (target_block_bytes // (w * itemsize)) // 8 * 8)
    if rows <= target_rows:
        rb = rows
        n_blocks = 1
    else:
        rb = target_rows
        n_blocks = pl.cdiv(rows, rb)

    # Always split the block range across 2 slabs whenever there is more than one block,
    # so both v7x TensorCores stream half of HBM even when n_blocks is odd.  A phantom
    # tail block (odd n_blocks) is skipped inside the kernel and its input index clamped.
    num_slabs = 2 if n_blocks >= 2 else 1
    blocks_per_slab = pl.cdiv(n_blocks, num_slabs)
    has_phantom = (num_slabs * blocks_per_slab) != n_blocks
    mask_tail = (n_blocks * rb) != rows

    kernel = functools.partial(
        _dice_partial_kernel,
        rows=rows, rb=rb, n_blocks=n_blocks, blocks_per_slab=blocks_per_slab,
        mask_tail=mask_tail, has_phantom=has_phantom)

    if has_phantom:
        def in_index(s, i, bps=blocks_per_slab, last=n_blocks - 1):
            return (jnp.minimum(s * bps + i, last), 0)
    else:
        def in_index(s, i, bps=blocks_per_slab):
            return (s * bps + i, 0)

    in_spec = pl.BlockSpec((rb, w), in_index)
    out_spec = pl.BlockSpec((1, 1, 128), lambda s, i: (s, 0, 0))

    inter_p, denom_p = pl.pallas_call(
        kernel,
        out_shape=(
            jax.ShapeDtypeStruct((num_slabs, 1, 128), jnp.float32),
            jax.ShapeDtypeStruct((num_slabs, 1, 128), jnp.float32),
        ),
        grid_spec=pltpu.PrefetchScalarGridSpec(
            num_scalar_prefetch=0,
            grid=(num_slabs, blocks_per_slab),
            in_specs=[in_spec, in_spec],
            out_specs=(out_spec, out_spec),
            scratch_shapes=[pltpu.VMEM((1, w), jnp.float32),
                            pltpu.VMEM((1, w), jnp.float32)],
        ),
        compiler_params=pltpu.CompilerParams(
            dimension_semantics=("parallel", "arbitrary"),
            vmem_limit_bytes=_VMEM_LIMIT_BYTES,
        ),
    )(yt, yp)

    # Tiny epilogue: sum num_slabs (<=2) per-core scalars + final divide.
    intersection = jnp.sum(inter_p[:, 0, 0])
    denom = jnp.sum(denom_p[:, 0, 0])
    return (2.0 * intersection + SMOOTHING) / (denom + SMOOTHING)


def dice_ref(y_true, y_pred):
    bs = y_true.shape[0]
    yt = jnp.reshape(y_true, (bs, -1)).astype(jnp.float32)
    yp = jnp.reshape(y_pred, (bs, -1)).astype(jnp.float32)
    inter = jnp.sum(yt * yp)
    return (2.0 * inter + SMOOTHING) / (jnp.sum(yt) + jnp.sum(yp) + SMOOTHING)


if __name__ == "__main__":
    key = jax.random.PRNGKey(0)

    # Test 1: NCHW segmentation tensors, matching the PyTorch module's expected inputs.
    k1, k2, k3, k4, k5, k6 = jax.random.split(key, 6)
    y_true = (jax.random.uniform(k1, (2, 4, 16, 16)) > 0.5).astype(jnp.float32)
    y_pred = jax.random.uniform(k2, (2, 4, 16, 16), dtype=jnp.float32)
    out = jax.block_until_ready(dice(y_true, y_pred))
    ref = dice_ref(y_true, y_pred)
    assert jnp.allclose(out, ref, rtol=1e-5, atol=1e-6), (out, ref)

    # Test 2: element count not a multiple of 128 (exercises the pad fallback).
    y_true2 = (jax.random.uniform(k3, (2, 3, 5, 7)) > 0.5).astype(jnp.float32)
    y_pred2 = jax.random.uniform(k4, (2, 3, 5, 7), dtype=jnp.float32)
    out2 = jax.block_until_ready(dice(y_true2, y_pred2))
    ref2 = dice_ref(y_true2, y_pred2)
    assert jnp.allclose(out2, ref2, rtol=1e-5, atol=1e-6), (out2, ref2)

    # Test 3: tiny block size to exercise the multi-block / 2-slab / phantom-block /
    # masked-tail paths on a small tensor (rows=19, rb=8, n_blocks=3, slabs=2).
    y_true3 = (jax.random.uniform(k5, (2, 19, 8, 8)) > 0.5).astype(jnp.float32)
    y_pred3 = jax.random.uniform(k6, (2, 19, 8, 8), dtype=jnp.float32)
    out3 = jax.block_until_ready(dice(y_true3, y_pred3, target_block_bytes=4096))
    ref3 = dice_ref(y_true3, y_pred3)
    assert jnp.allclose(out3, ref3, rtol=1e-5, atol=1e-6), (out3, ref3)

    print("KERNEL_OK")
</pallas_src>

<mosaic_0001>
module attributes {stable_mosaic.version = 11 : i64} {
  func.func @_dice_partial_kernel(%arg0: i32, %arg1: i32, %arg2: memref<8x256xf32, #tpu.memory_space<vmem>>, %arg3: memref<8x256xf32, #tpu.memory_space<vmem>>, %arg4: memref<1x1x128xf32, #tpu.memory_space<vmem>>, %arg5: memref<1x1x128xf32, #tpu.memory_space<vmem>>, %arg6: memref<1x256xf32, #tpu.memory_space<vmem>>, %arg7: memref<1x256xf32, #tpu.memory_space<vmem>>) attributes {dimension_semantics = [#tpu.dimension_semantics<parallel>, #tpu.dimension_semantics<arbitrary>], iteration_bounds = array<i64: 1, 1>, scalar_prefetch = 0 : i64, scratch_operands = 2 : i64, tpu.core_type = #tpu.core_type<tc>, window_params = [{transform_indices = @transform_0, window_bounds = array<i64: 8, 256>}, {transform_indices = @transform_1, window_bounds = array<i64: 8, 256>}, {transform_indices = @transform_2, window_bounds = array<i64: 1, 1, 128>}, {transform_indices = @transform_3, window_bounds = array<i64: 1, 1, 128>}]} {
    %c0_i32 = arith.constant 0 : i32
    %0 = arith.cmpi eq, %arg1, %c0_i32 : i32
    %1 = arith.extui %0 : i1 to i32
    %c0_i32_0 = arith.constant 0 : i32
    %2 = arith.cmpi ne, %1, %c0_i32_0 : i32
    scf.if %2 {
      %cst_15 = arith.constant 0.000000e+00 : f32
      %20 = vector.broadcast %cst_15 : f32 to vector<1x256xf32>
      %c0_16 = arith.constant 0 : index
      %c0_17 = arith.constant 0 : index
      %21 = vector.load %arg6[%c0_16, %c0_17] : memref<1x256xf32, #tpu.memory_space<vmem>>, vector<1x256xf32>
      tpu.vector_store %arg6[%c0_16, %c0_17], %20 {strides = array<i32>} : memref<1x256xf32, #tpu.memory_space<vmem>>, vector<1x256xf32>,
      %cst_18 = arith.constant 0.000000e+00 : f32
      %22 = vector.broadcast %cst_18 : f32 to vector<1x256xf32>
      %c0_19 = arith.constant 0 : index
      %c0_20 = arith.constant 0 : index
      %23 = vector.load %arg7[%c0_19, %c0_20] : memref<1x256xf32, #tpu.memory_space<vmem>>, vector<1x256xf32>
      tpu.vector_store %arg7[%c0_19, %c0_20], %22 {strides = array<i32>} : memref<1x256xf32, #tpu.memory_space<vmem>>, vector<1x256xf32>,
    } else {
    }
    %c0 = arith.constant 0 : index
    %c0_1 = arith.constant 0 : index
    %3 = vector.load %arg2[%c0, %c0_1] : memref<8x256xf32, #tpu.memory_space<vmem>>, vector<8x256xf32>
    %c0_2 = arith.constant 0 : index
    %c0_3 = arith.constant 0 : index
    %4 = vector.load %arg3[%c0_2, %c0_3] : memref<8x256xf32, #tpu.memory_space<vmem>>, vector<8x256xf32>
    %c0_4 = arith.constant 0 : index
    %c0_5 = arith.constant 0 : index
    %5 = vector.load %arg6[%c0_4, %c0_5] : memref<1x256xf32, #tpu.memory_space<vmem>>, vector<1x256xf32>
    %6 = arith.mulf %3, %4 : vector<8x256xf32>
    %cst = arith.constant dense<0.000000e+00> : vector<256xf32>
    %7 = vector.multi_reduction <add>, %6, %cst [0] : vector<8x256xf32> to vector<256xf32>
    %8 = vector.shape_cast %7 : vector<256xf32> to vector<1x256xf32>
    %9 = arith.addf %5, %8 : vector<1x256xf32>
    %c0_6 = arith.constant 0 : index
    %c0_7 = arith.constant 0 : index
    %10 = vector.load %arg6[%c0_6, %c0_7] : memref<1x256xf32, #tpu.memory_space<vmem>>, vector<1x256xf32>
    tpu.vector_store %arg6[%c0_6, %c0_7], %9 {strides = array<i32>} : memref<1x256xf32, #tpu.memory_space<vmem>>, vector<1x256xf32>,
    %c0_8 = arith.constant 0 : index
    %c0_9 = arith.constant 0 : index
    %11 = vector.load %arg7[%c0_8, %c0_9] : memref<1x256xf32, #tpu.memory_space<vmem>>, vector<1x256xf32>
    %12 = arith.addf %3, %4 : vector<8x256xf32>
    %cst_10 = arith.constant dense<0.000000e+00> : vector<256xf32>
    %13 = vector.multi_reduction <add>, %12, %cst_10 [0] : vector<8x256xf32> to vector<256xf32>
    %14 = vector.shape_cast %13 : vector<256xf32> to vector<1x256xf32>
    %15 = arith.addf %11, %14 : vector<1x256xf32>
    %c0_11 = arith.constant 0 : index
    %c0_12 = arith.constant 0 : index
    %16 = vector.load %arg7[%c0_11, %c0_12] : memref<1x256xf32, #tpu.memory_space<vmem>>, vector<1x256xf32>
    tpu.vector_store %arg7[%c0_11, %c0_12], %15 {strides = array<i32>} : memref<1x256xf32, #tpu.memory_space<vmem>>, vector<1x256xf32>,
    %c0_i32_13 = arith.constant 0 : i32
    %17 = arith.cmpi eq, %arg1, %c0_i32_13 : i32
    %18 = arith.extui %17 : i1 to i32
    %c0_i32_14 = arith.constant 0 : i32
    %19 = arith.cmpi ne, %18, %c0_i32_14 : i32
    scf.if %19 {
      %c0_15 = arith.constant 0 : index
      %c0_16 = arith.constant 0 : index
      %20 = vector.load %arg6[%c0_15, %c0_16] : memref<1x256xf32, #tpu.memory_space<vmem>>, vector<1x256xf32>
      %21 = vector.shape_cast %20 : vector<1x256xf32> to vector<1x1x256xf32>
      %cst_17 = arith.constant dense<0.000000e+00> : vector<1xf32>
      %22 = vector.multi_reduction <add>, %21, %cst_17 [1, 2] : vector<1x1x256xf32> to vector<1xf32>
      %23 = vector.shape_cast %22 : vector<1xf32> to vector<1x1x1xf32>
      %24 = vector.extract %23[0, 0, 0] : f32 from vector<1x1x1xf32>
      %25 = vector.broadcast %24 : f32 to vector<1x1x128xf32>
      %c0_18 = arith.constant 0 : index
      %c0_19 = arith.constant 0 : index
      %c0_20 = arith.constant 0 : index
      %26 = vector.load %arg4[%c0_18, %c0_19, %c0_20] : memref<1x1x128xf32, #tpu.memory_space<vmem>>, vector<1x1x128xf32>
      tpu.vector_store %arg4[%c0_18, %c0_19, %c0_20], %25 {strides = array<i32>} : memref<1x1x128xf32, #tpu.memory_space<vmem>>, vector<1x1x128xf32>,
      %c0_21 = arith.constant 0 : index
      %c0_22 = arith.constant 0 : index
      %27 = vector.load %arg7[%c0_21, %c0_22] : memref<1x256xf32, #tpu.memory_space<vmem>>, vector<1x256xf32>
      %28 = vector.shape_cast %27 : vector<1x256xf32> to vector<1x1x256xf32>
      %cst_23 = arith.constant dense<0.000000e+00> : vector<1xf32>
      %29 = vector.multi_reduction <add>, %28, %cst_23 [1, 2] : vector<1x1x256xf32> to vector<1xf32>
      %30 = vector.shape_cast %29 : vector<1xf32> to vector<1x1x1xf32>
      %31 = vector.extract %30[0, 0, 0] : f32 from vector<1x1x1xf32>
      %32 = vector.broadcast %31 : f32 to vector<1x1x128xf32>
      %c0_24 = arith.constant 0 : index
      %c0_25 = arith.constant 0 : index
      %c0_26 = arith.constant 0 : index
      %33 = vector.load %arg5[%c0_24, %c0_25, %c0_26] : memref<1x1x128xf32, #tpu.memory_space<vmem>>, vector<1x1x128xf32>
      tpu.vector_store %arg5[%c0_24, %c0_25, %c0_26], %32 {strides = array<i32>} : memref<1x1x128xf32, #tpu.memory_space<vmem>>, vector<1x1x128xf32>,
    } else {
    }
    return
  }
  func.func @transform_0(%arg0: i32, %arg1: i32) -> (i32, i32) {
    %c1_i32 = arith.constant 1 : i32
    %0 = arith.muli %arg0, %c1_i32 : i32
    %1 = arith.addi %0, %arg1 : i32
    %c0_i32 = arith.constant 0 : i32
    %c0_i32_0 = arith.constant 0 : i32
    return %1, %c0_i32 : i32, i32
  }
  func.func @transform_1(%arg0: i32, %arg1: i32) -> (i32, i32) {
    %c1_i32 = arith.constant 1 : i32
    %0 = arith.muli %arg0, %c1_i32 : i32
    %1 = arith.addi %0, %arg1 : i32
    %c0_i32 = arith.constant 0 : i32
    %c0_i32_0 = arith.constant 0 : i32
    return %1, %c0_i32 : i32, i32
  }
  func.func @transform_2(%arg0: i32, %arg1: i32) -> (i32, i32, i32) {
    %c0_i32 = arith.constant 0 : i32
    %c0_i32_0 = arith.constant 0 : i32
    %c0_i32_1 = arith.constant 0 : i32
    return %arg0, %c0_i32, %c0_i32_0 : i32, i32, i32
  }
  func.func @transform_3(%arg0: i32, %arg1: i32) -> (i32, i32, i32) {
    %c0_i32 = arith.constant 0 : i32
    %c0_i32_0 = arith.constant 0 : i32
    %c0_i32_1 = arith.constant 0 : i32
    return %arg0, %c0_i32, %c0_i32_0 : i32, i32, i32
  }
}

</mosaic_0001>

<llo_original>
// kernel: dice.1
$region0: #{dice.1}
  #allocation0 [shape = 'u32[]', space=smem, size = 0x4, offset = 0x4, fixed_abs, tag = 'smem constant byte address 0x4 - core index']
  #allocation1 [shape = 'u32[72,128]{1,0:T(1,128)}', space=vmem, size = 0x9000, scoped, tag = 'internal scratch']
  #allocation2 [shape = 'f32[1,256]{1,0:T(1,128)}', space=vmem, size = 0x400, scoped, tag = 'scratch operand']
  #allocation3 [shape = 'f32[1,256]{1,0:T(1,128)}', space=vmem, size = 0x400, scoped, tag = 'scratch operand']
  %s0 = inlined_call_operand.vmem [shape: f32[8,256], index: 0, kind: input, shape index: {}]
  %s1 = inlined_call_operand.vmem [shape: f32[8,256], index: 1, kind: input, shape index: {}]
  %s2 = inlined_call_operand.vmem [shape: f32[1,1,128], index: 2, kind: output, shape index: {0}]
  %s3 = inlined_call_operand.vmem [shape: f32[1,1,128], index: 3, kind: output, shape index: {1}]
  %4 = xla_tuple %s2, %s3
  %s5 = sld [smem:[#allocation0]]
  $region34: #{dice.1} parent=0
    _
  %s7 = ssub.s32 1, %s5
  %s8 = scalar_select 0, %s7, %s5
  // Predicated region
  $region2: #{dice.1} parent=0 // pred_check
    _
  $region3: #{dice.1} parent=0 // pred_check_branch
    %10 = sbr.rel (0) target = $region5
  $region4: #{dice.1} parent=0 // pred_region
    %s11 = sadd.s32 0, 0
    %p12 = scmp.lt.s32.totalorder %s11, 0
    %s13 = scalar_select %p12, %s11, 0
    %s14 = smul.addr %s13, 2
    %s15 = smul.addr %s14, 8
    %s16 = scalar_lea.vmem %s0, %s15
    %s17 = sadd.s32 0, 0
  $region5: #{dice.1} parent=0 // pred_fallthru
    _
  // Predicated region
  $region6: #{dice.1} parent=0 // pred_check
    _
  $region7: #{dice.1} parent=0 // pred_check_branch
    %19 = sbr.rel (0) target = $region9
  $region8: #{dice.1} parent=0 // pred_region
    %s20 = sadd.s32 0, 0
    %p21 = scmp.lt.s32.totalorder %s20, 0
    %s22 = scalar_select %p21, %s20, 0
    %s23 = smul.addr %s22, 2
    %s24 = smul.addr %s23, 8
    %s25 = scalar_lea.vmem %s1, %s24
    %s26 = sadd.s32 0, 0
  $region9: #{dice.1} parent=0 // pred_fallthru
    _
  %s27 = sadd.s32 0, 0
  %p28 = scmp.lt.s32.totalorder %s27, 0
  %s29 = scalar_select %p28, %s27, 0
  %s30 = smul.addr %s29, 2
  %s31 = smul.addr %s30, 8
  %s32 = scalar_lea.vmem %s0, %s31
  %s33 = sadd.s32 0, 0
  %p34 = scmp.lt.s32.totalorder %s33, 0
  %s35 = scalar_select %p34, %s33, 0
  %s36 = smul.addr %s35, 2
  %s37 = smul.addr %s36, 8
  %s38 = scalar_lea.vmem %s1, %s37
  %s39 = sadd.s32 0, 0
  %p40 = scmp.lt.s32.totalorder %s39, 0
  %s41 = scalar_select %p40, %s39, 0
  %s42 = smul.addr %s41, 2
  %s43 = smul.addr %s42, 8
  %s44 = scalar_lea.vmem %s0, %s43
  %s45 = sadd.s32 0, 0
  %s46 = sadd.s32 0, 0
  %p47 = scmp.lt.s32.totalorder %s46, 0
  %s48 = scalar_select %p47, %s46, 0
  %s49 = smul.addr %s48, 2
  %s50 = smul.addr %s49, 8
  %s51 = scalar_lea.vmem %s1, %s50
  %s52 = sadd.s32 0, 0
  %p53 = scmp.eq.s32.totalorder 0, 0
  // Predicated region
  $region10: #{dice.1} parent=0 // pred_check
    %p54 = pneg %p53
  $region11: #{dice.1} parent=0 // pred_check_branch
    %56 = sbr.rel (%p54) target = $region13
  $region12: #{dice.1} parent=0 // pred_region
    %v57 = vlaneseq
    %vm58 = vcmp.ge.s32.totalorder %v57, 0
    %vm59 = vcmp.lt.s32.totalorder %v57, 256
    %vm60 = vmand %vm58, %vm59
    %61 = vst.msk [vmem:[#allocation2] sm:$0x3] %vm60, 0.0
    %62 = vst.msk [vmem:[#allocation3] sm:$0x3] %vm60, 0.0
  $region13: #{dice.1} parent=0 // pred_fallthru
    _
  %v63 = vld [vmem:[%s44] sm:$0xff]
  %v64 = vld [vmem:[%s44 + $0x8] sm:$0xff]
  %v65 = vld [vmem:[%s51] sm:$0xff]
  %v66 = vld [vmem:[%s51 + $0x8] sm:$0xff]
  %v67 = vld [vmem:[#allocation2] sm:$0x3]
  %v68 = vmul.f32 %v63, %v65
  %v69 = vmul.f32 %v64, %v66
  %v70 = vrot.slane %v68, 4
  %v71 = vadd.f32 %v68, %v70
  %v72 = vrot.slane %v71, 2
  %v73 = vadd.f32 %v71, %v72
  %v74 = vrot.slane %v73, 1
  %v75 = vadd.f32 %v73, %v74
  %v76 = vrot.slane %v69, 4
  %v77 = vadd.f32 %v69, %v76
  %v78 = vrot.slane %v77, 2
  %v79 = vadd.f32 %v77, %v78
  %v80 = vrot.slane %v79, 1
  %v81 = vadd.f32 %v79, %v80
  %v84 = vrot.slane %v81, 7
  %vm85 = vcmask 1040384
  %v86 = vsel %vm85, %v75, %v84
  %v88 = vadd.f32 %v67, %v86
  %v89 = vlaneseq
  %vm90 = vcmp.ge.s32.totalorder %v89, 0
  %vm91 = vcmp.lt.s32.totalorder %v89, 256
  %vm92 = vmand %vm90, %vm91
  %93 = vst.msk [vmem:[#allocation2] sm:$0x3] %vm92, %v88
  %v94 = vld [vmem:[#allocation3] sm:$0x3]
  %v95 = vadd.f32 %v63, %v65
  %v96 = vadd.f32 %v64, %v66
  %v97 = vrot.slane %v95, 4
  %v98 = vadd.f32 %v95, %v97
  %v99 = vrot.slane %v98, 2
  %v100 = vadd.f32 %v98, %v99
  %v101 = vrot.slane %v100, 1
  %v102 = vadd.f32 %v100, %v101
  %v103 = vrot.slane %v96, 4
  %v104 = vadd.f32 %v96, %v103
  %v105 = vrot.slane %v104, 2
  %v106 = vadd.f32 %v104, %v105
  %v107 = vrot.slane %v106, 1
  %v108 = vadd.f32 %v106, %v107
  %v111 = vrot.slane %v108, 7
  %v112 = vsel %vm85, %v102, %v111
  %v114 = vadd.f32 %v94, %v112
  %115 = vst.msk [vmem:[#allocation3] sm:$0x3] %vm92, %v114
  // Predicated region
  $region14: #{dice.1} parent=0 // pred_check
    %p116 = pneg %p53
  $region15: #{dice.1} parent=0 // pred_check_branch
    %118 = sbr.rel (%p116) target = $region17
  $region16: #{dice.1} parent=0 // pred_region
    %v119 = vld [vmem:[#allocation2] sm:$0x3]
    %v121 = vperm.slane %v119, 0
    %v122 = vperm.slane %v119, 1
    %v125 = vsel %vm85, %v121, 0.0
    %v126 = vsel %vm85, %v122, 0.0
    %v127 = vadd.f32 %v125, %v126
    %128 = vadd.xlane.f32.xlu0 %v127
    %v129 = vpop.xlane.xlu0 %128
    %v130 = vrot.slane %v129, 4
    %v131 = vadd.f32 %v129, %v130
    %v132 = vrot.slane %v131, 2
    %v133 = vadd.f32 %v131, %v132
    %v134 = vrot.slane %v133, 1
    %v135 = vadd.f32 %v133, %v134
    %s136 = vtos %v135
    %v137 = vstv %s136
    %138 = vst [vmem:[%s2] sm:$0x1] %v137
    %v139 = vld [vmem:[#allocation3] sm:$0x3]
    %v141 = vperm.slane %v139, 0
    %v142 = vperm.slane %v139, 1
    %v145 = vsel %vm85, %v141, 0.0
    %v146 = vsel %vm85, %v142, 0.0
    %v147 = vadd.f32 %v145, %v146
    %148 = vadd.xlane.f32.xlu0 %v147
    %v149 = vpop.xlane.xlu0 %148
    %v150 = vrot.slane %v149, 4
    %v151 = vadd.f32 %v149, %v150
    %v152 = vrot.slane %v151, 2
    %v153 = vadd.f32 %v151, %v152
    %v154 = vrot.slane %v153, 1
    %v155 = vadd.f32 %v153, %v154
    %s156 = vtos %v155
    %v157 = vstv %s156
    %158 = vst [vmem:[%s3] sm:$0x1] %v157
  $region17: #{dice.1} parent=0 // pred_fallthru
    _
  // Predicated region
  $region18: #{dice.1} parent=0 // pred_check
    _
  $region19: #{dice.1} parent=0 // pred_check_branch
    %160 = sbr.rel (0) target = $region21
  $region20: #{dice.1} parent=0 // pred_region
    _
  $region21: #{dice.1} parent=0 // pred_fallthru
    _
  // Predicated region
  $region22: #{dice.1} parent=0 // pred_check
    _
  $region23: #{dice.1} parent=0 // pred_check_branch
    %162 = sbr.rel (0) target = $region25
  $region24: #{dice.1} parent=0 // pred_region
    _
  $region25: #{dice.1} parent=0 // pred_fallthru
    _
  // Predicated region
  $region26: #{dice.1} parent=0 // pred_check
    _
  $region27: #{dice.1} parent=0 // pred_check_branch
    %164 = sbr.rel (0) target = $region29
  $region28: #{dice.1} parent=0 // pred_region
    _
  $region29: #{dice.1} parent=0 // pred_fallthru
    _
  // Predicated region
  $region30: #{dice.1} parent=0 // pred_check
    _
  $region31: #{dice.1} parent=0 // pred_check_branch
    %166 = sbr.rel (0) target = $region33
  $region32: #{dice.1} parent=0 // pred_region
    _
  $region33: #{dice.1} parent=0 // pred_fallthru
    _

</llo_original>
